<compile_context>
chip_gen: v7x
topology: tpu7x:2x2x1
jax: 0.10.0
libtpu: 0.0.40
codegen_flags: <defaults>
</compile_context>

<pallas_src>
import functools

import jax
import jax.numpy as jnp
import numpy as np
from jax.experimental import pallas as pl
from jax.experimental.pallas import tpu as pltpu


def _double_conv_kernel(x_ref, b1w_ref, c2w_ref, bias1_ref, bias2_ref, o_ref,
                        *, H):
    """Fused (conv3x3 + ReLU) * 2 over the whole batch, lane-dense layout.

    x_ref:     (N*H, W*Cin)        bf16, rows=(image,row), lanes=(col,chan)
    b1w_ref:   (3, W*Cin, W*Cout)  bf16 banded conv1 weights (one slab per dy)
    c2w_ref:   (3, W*Cout, W*Cout) bf16 banded conv2 weights
    bias1_ref: (1, W*Cout)         f32 conv1 bias tiled over W
    bias2_ref: (1, W*Cout)         f32 conv2 bias tiled over W
    o_ref:     (N*H, W*Cout)       lane-dense output (128 lanes, unmasked vst)
    """
    NH = o_ref.shape[0]

    # Per-image row-boundary masks (batch images are stacked along rows).
    row = jax.lax.broadcasted_iota(jnp.int32, (NH, 1), 0)
    h = row % H
    m_top = (h != 0).astype(jnp.float32)       # no valid row above in image
    m_bot = (h != H - 1).astype(jnp.float32)   # no valid row below in image

    def conv3x3_relu(inp, w_ref, bias):
        # Column (dx) halo is folded into the banded weights; the row (dy)
        # halo is a roll of the f32 partial results (XLU) + mask (VPU), so
        # the MXU only sees three fat matmuls per conv.
        p_up = jnp.dot(inp, w_ref[0], preferred_element_type=jnp.float32)
        p_mid = jnp.dot(inp, w_ref[1], preferred_element_type=jnp.float32)
        p_dn = jnp.dot(inp, w_ref[2], preferred_element_type=jnp.float32)
        acc = p_mid + bias
        acc = acc + m_top * pltpu.roll(p_up, shift=1, axis=0)       # p_up[r-1]
        acc = acc + m_bot * pltpu.roll(p_dn, shift=NH - 1, axis=0)  # p_dn[r+1]
        return jnp.maximum(acc, 0.0)

    y1 = conv3x3_relu(x_ref[...], b1w_ref, bias1_ref[...])
    # norm1 = Identity, dropout1 = Identity (eval mode)
    y2 = conv3x3_relu(y1.astype(jnp.bfloat16), c2w_ref, bias2_ref[...])
    # norm2 = Identity, dropout2 = Identity (eval mode)
    o_ref[...] = y2.astype(o_ref.dtype)


def _banded_weights(w_hwio, width):
    """Banded block weights (3, width*Cin, width*Cout), SAME col-pad folded in.

    out[dy, u*Cin + ci, w*Cout + c] = w_hwio[dy, dx, ci, c] with dx = u - w + 1,
    zero outside 0 <= dx <= 2 (i.e. padding=1 along the width axis).
    """
    cin, cout = w_hwio.shape[2], w_hwio.shape[3]
    mats = []
    for dy in range(3):
        m = jnp.zeros((width * cin, width * cout), jnp.float32)
        for dx in range(3):
            p = jnp.eye(width, width, k=1 - dx, dtype=jnp.float32)
            m = m + jnp.kron(p, w_hwio[dy, dx].astype(jnp.float32))
        mats.append(m)
    return jnp.stack(mats)


@jax.jit
def double_conv2d(x_nchw, w1, b1, w2, b2):
    """x_nchw: (N, Cin, H, W); w: (Cout, Cin, 3, 3), b: (Cout,) PyTorch layout."""
    N, Cin, H, W = x_nchw.shape
    Cout = w1.shape[0]
    WCi, WCo, NH = W * Cin, W * Cout, N * H

    # NCHW -> lane-dense (N*H, W*Cin) bf16.  # NOTE: if the surrounding model
    # adopts NHWC / this lane-dense layout, these layout ops disappear.
    x2d = (jnp.transpose(x_nchw, (0, 2, 3, 1))
           .reshape(NH, WCi).astype(jnp.bfloat16))

    # (Cout, Cin, 3, 3) -> (dy, dx, Cin, Cout).  Banded weights are rebuilt
    # under jit here; in a real model they would be precomputed once.
    w1_hwio = jnp.transpose(w1, (2, 3, 1, 0))
    w2_hwio = jnp.transpose(w2, (2, 3, 1, 0))
    b1w = _banded_weights(w1_hwio, W).astype(jnp.bfloat16)   # (3, WCi, WCo)
    c2w = _banded_weights(w2_hwio, W).astype(jnp.bfloat16)   # (3, WCo, WCo)

    bias1 = jnp.tile(b1.astype(jnp.float32), W).reshape(1, WCo)
    bias2 = jnp.tile(b2.astype(jnp.float32), W).reshape(1, WCo)

    out2d = pl.pallas_call(
        functools.partial(_double_conv_kernel, H=H),
        out_shape=jax.ShapeDtypeStruct((NH, WCo), x_nchw.dtype),
        grid=(1,),
        in_specs=[
            pl.BlockSpec((NH, WCi), lambda i: (0, 0)),
            pl.BlockSpec((3, WCi, WCo), lambda i: (0, 0, 0)),
            pl.BlockSpec((3, WCo, WCo), lambda i: (0, 0, 0)),
            pl.BlockSpec((1, WCo), lambda i: (0, 0)),
            pl.BlockSpec((1, WCo), lambda i: (0, 0)),
        ],
        out_specs=pl.BlockSpec((NH, WCo), lambda i: (0, 0)),
        compiler_params=pltpu.CompilerParams(
            dimension_semantics=("arbitrary",)),
    )(x2d, b1w, c2w, bias1, bias2)

    # (N*H, W*Cout) -> NCHW (wrapper-side layout plumbing only).
    return jnp.transpose(out2d.reshape(N, H, W, Cout), (0, 3, 1, 2))


def _reference(x_nchw, w1, b1, w2, b2):
    """Pure-JAX f32 reference using lax.conv (NHWC), eval-mode dropout."""
    dn = ("NHWC", "HWIO", "NHWC")
    x = jnp.transpose(x_nchw, (0, 2, 3, 1))
    w1_h = jnp.transpose(w1, (2, 3, 1, 0))
    w2_h = jnp.transpose(w2, (2, 3, 1, 0))
    y = jax.lax.conv_general_dilated(x, w1_h, (1, 1), "SAME",
                                     dimension_numbers=dn) + b1
    y = jnp.maximum(y, 0.0)
    y = jax.lax.conv_general_dilated(y, w2_h, (1, 1), "SAME",
                                     dimension_numbers=dn) + b2
    y = jnp.maximum(y, 0.0)
    return jnp.transpose(y, (0, 3, 1, 2))


if __name__ == "__main__":
    # DoubleConv2D(in_channels=4, out_channels=8, norms='NN'), eval mode.
    N, Cin, H, W = 2, 4, 16, 16
    Cout = 8

    key = jax.random.PRNGKey(0)
    k_x, k_w1, k_b1, k_w2, k_b2 = jax.random.split(key, 5)

    x = jax.random.normal(k_x, (N, Cin, H, W), dtype=jnp.float32)

    # Deterministic Kaiming-uniform-style init (matches PyTorch param shapes).
    fan1 = Cin * 3 * 3
    bound1 = 1.0 / np.sqrt(fan1)
    w1 = jax.random.uniform(k_w1, (Cout, Cin, 3, 3), jnp.float32,
                            -bound1, bound1)
    b1 = jax.random.uniform(k_b1, (Cout,), jnp.float32, -bound1, bound1)

    fan2 = Cout * 3 * 3
    bound2 = 1.0 / np.sqrt(fan2)
    w2 = jax.random.uniform(k_w2, (Cout, Cout, 3, 3), jnp.float32,
                            -bound2, bound2)
    b2 = jax.random.uniform(k_b2, (Cout,), jnp.float32, -bound2, bound2)

    out = jax.block_until_ready(double_conv2d(x, w1, b1, w2, b2))
    ref = jax.block_until_ready(_reference(x, w1, b1, w2, b2))

    # bf16 matmul operands (f32 accumulate) vs the f32 reference -> ~1e-2 tol.
    np.testing.assert_allclose(np.asarray(out), np.asarray(ref),
                               rtol=2e-2, atol=2e-2)

    print("KERNEL_OK")
</pallas_src>

<mosaic_0001>
module attributes {stable_mosaic.version = 11 : i64} {
  func.func @_double_conv_kernel(%arg0: i32, %arg1: memref<32x64xbf16, #tpu.memory_space<vmem>>, %arg2: memref<3x64x128xbf16, #tpu.memory_space<vmem>>, %arg3: memref<3x128x128xbf16, #tpu.memory_space<vmem>>, %arg4: memref<1x128xf32, #tpu.memory_space<vmem>>, %arg5: memref<1x128xf32, #tpu.memory_space<vmem>>, %arg6: memref<32x128xf32, #tpu.memory_space<vmem>>) attributes {dimension_semantics = [#tpu.dimension_semantics<arbitrary>], iteration_bounds = array<i64: 1>, scalar_prefetch = 0 : i64, scratch_operands = 0 : i64, tpu.core_type = #tpu.core_type<tc>, window_params = [{pipeline_mode = #tpu.pipeline_mode<synchronous>, transform_indices = @transform_0, window_bounds = array<i64: 32, 64>}, {pipeline_mode = #tpu.pipeline_mode<synchronous>, transform_indices = @transform_1, window_bounds = array<i64: 3, 64, 128>}, {pipeline_mode = #tpu.pipeline_mode<synchronous>, transform_indices = @transform_2, window_bounds = array<i64: 3, 128, 128>}, {pipeline_mode = #tpu.pipeline_mode<synchronous>, transform_indices = @transform_3, window_bounds = array<i64: 1, 128>}, {pipeline_mode = #tpu.pipeline_mode<synchronous>, transform_indices = @transform_4, window_bounds = array<i64: 1, 128>}, {pipeline_mode = #tpu.pipeline_mode<synchronous>, transform_indices = @transform_5, window_bounds = array<i64: 32, 128>}]} {
    %0 = tpu.iota {dimensions = array<i32: 0>} : vector<32x1xi32>
    %c16_i32 = arith.constant 16 : i32
    %c0_i32 = arith.constant 0 : i32
    %1 = arith.cmpi eq, %c16_i32, %c0_i32 : i32
    %c1_i32 = arith.constant 1 : i32
    %2 = arith.select %1, %c1_i32, %c16_i32 : i32
    %3 = vector.broadcast %2 : i32 to vector<32x1xi32>
    %4 = arith.remsi %0, %3 : vector<32x1xi32>
    %c0_i32_0 = arith.constant 0 : i32
    %5 = vector.broadcast %c0_i32_0 : i32 to vector<32x1xi32>
    %6 = arith.cmpi ne, %4, %5 : vector<32x1xi32>
    %c0_i32_1 = arith.constant 0 : i32
    %7 = vector.broadcast %c0_i32_1 : i32 to vector<32x1xi32>
    %8 = arith.cmpi slt, %4, %7 : vector<32x1xi32>
    %c0_i32_2 = arith.constant 0 : i32
    %9 = arith.cmpi slt, %2, %c0_i32_2 : i32
    %10 = vector.broadcast %9 : i1 to vector<32x1xi1>
    %11 = vector.broadcast %10 : vector<32x1xi1> to vector<32x1xi1>
    %12 = arith.xori %8, %11 : vector<32x1xi1>
    %13 = arith.andi %12, %6 : vector<32x1xi1>
    %14 = vector.broadcast %2 : i32 to vector<32x1xi32>
    %15 = arith.addi %4, %14 : vector<32x1xi32>
    %16 = arith.select %13, %15, %4 : vector<32x1xi1>, vector<32x1xi32>
    %c0_i32_3 = arith.constant 0 : i32
    %17 = vector.broadcast %c0_i32_3 : i32 to vector<32x1xi32>
    %18 = arith.cmpi ne, %16, %17 : vector<32x1xi32>
    %19 = arith.extui %18 : vector<32x1xi1> to vector<32x1xi32>
    %20 = arith.sitofp %19 : vector<32x1xi32> to vector<32x1xf32>
    %c15_i32 = arith.constant 15 : i32
    %21 = vector.broadcast %c15_i32 : i32 to vector<32x1xi32>
    %22 = arith.cmpi ne, %16, %21 : vector<32x1xi32>
    %23 = arith.extui %22 : vector<32x1xi1> to vector<32x1xi32>
    %24 = arith.sitofp %23 : vector<32x1xi32> to vector<32x1xf32>
    %c0 = arith.constant 0 : index
    %c0_4 = arith.constant 0 : index
    %25 = vector.load %arg1[%c0, %c0_4] : memref<32x64xbf16, #tpu.memory_space<vmem>>, vector<32x64xbf16>
    %c0_5 = arith.constant 0 : index
    %c0_6 = arith.constant 0 : index
    %26 = vector.load %arg4[%c0_5, %c0_6] : memref<1x128xf32, #tpu.memory_space<vmem>>, vector<1x128xf32>
    %c0_7 = arith.constant 0 : index
    %c0_8 = arith.constant 0 : index
    %c0_9 = arith.constant 0 : index
    %27 = vector.load %arg2[%c0_7, %c0_8, %c0_9] : memref<3x64x128xbf16, #tpu.memory_space<vmem>>, vector<1x64x128xbf16>
    %28 = vector.shape_cast %27 : vector<1x64x128xbf16> to vector<64x128xbf16>
    %cst = arith.constant dense<0.000000e+00> : vector<32x128xf32>
    %29 = tpu.matmul %25, %28, %cst {dimension_numbers = #tpu.dot_dimension_numbers<[1], [0], [0], [1], [0, 0, 1, 1], [], []>} : vector<32x64xbf16>, vector<64x128xbf16>, vector<32x128xf32> -> vector<32x128xf32>
    %c1 = arith.constant 1 : index
    %c0_10 = arith.constant 0 : index
    %c0_11 = arith.constant 0 : index
    %30 = vector.load %arg2[%c1, %c0_10, %c0_11] : memref<3x64x128xbf16, #tpu.memory_space<vmem>>, vector<1x64x128xbf16>
    %31 = vector.shape_cast %30 : vector<1x64x128xbf16> to vector<64x128xbf16>
    %cst_12 = arith.constant dense<0.000000e+00> : vector<32x128xf32>
    %32 = tpu.matmul %25, %31, %cst_12 {dimension_numbers = #tpu.dot_dimension_numbers<[1], [0], [0], [1], [0, 0, 1, 1], [], []>} : vector<32x64xbf16>, vector<64x128xbf16>, vector<32x128xf32> -> vector<32x128xf32>
    %c2 = arith.constant 2 : index
    %c0_13 = arith.constant 0 : index
    %c0_14 = arith.constant 0 : index
    %33 = vector.load %arg2[%c2, %c0_13, %c0_14] : memref<3x64x128xbf16, #tpu.memory_space<vmem>>, vector<1x64x128xbf16>
    %34 = vector.shape_cast %33 : vector<1x64x128xbf16> to vector<64x128xbf16>
    %cst_15 = arith.constant dense<0.000000e+00> : vector<32x128xf32>
    %35 = tpu.matmul %25, %34, %cst_15 {dimension_numbers = #tpu.dot_dimension_numbers<[1], [0], [0], [1], [0, 0, 1, 1], [], []>} : vector<32x64xbf16>, vector<64x128xbf16>, vector<32x128xf32> -> vector<32x128xf32>
    %36 = vector.broadcast %26 : vector<1x128xf32> to vector<32x128xf32>
    %37 = arith.addf %32, %36 : vector<32x128xf32>
    %c1_i32_16 = arith.constant 1 : i32
    %38 = tpu.dynamic_rotate %29 by %c1_i32_16 dim 0 : vector<32x128xf32>, i32 -> vector<32x128xf32>
    %39 = vector.broadcast %20 : vector<32x1xf32> to vector<32x128xf32>
    %40 = arith.mulf %39, %38 : vector<32x128xf32>
    %41 = arith.addf %37, %40 : vector<32x128xf32>
    %c31_i32 = arith.constant 31 : i32
    %42 = tpu.dynamic_rotate %35 by %c31_i32 dim 0 : vector<32x128xf32>, i32 -> vector<32x128xf32>
    %43 = vector.broadcast %24 : vector<32x1xf32> to vector<32x128xf32>
    %44 = arith.mulf %43, %42 : vector<32x128xf32>
    %45 = arith.addf %41, %44 : vector<32x128xf32>
    %cst_17 = arith.constant 0.000000e+00 : f32
    %46 = vector.broadcast %cst_17 : f32 to vector<32x128xf32>
    %47 = arith.maximumf %45, %46 : vector<32x128xf32>
    %48 = arith.truncf %47 : vector<32x128xf32> to vector<32x128xbf16>
    %c0_18 = arith.constant 0 : index
    %c0_19 = arith.constant 0 : index
    %49 = vector.load %arg5[%c0_18, %c0_19] : memref<1x128xf32, #tpu.memory_space<vmem>>, vector<1x128xf32>
    %c0_20 = arith.constant 0 : index
    %c0_21 = arith.constant 0 : index
    %c0_22 = arith.constant 0 : index
    %50 = vector.load %arg3[%c0_20, %c0_21, %c0_22] : memref<3x128x128xbf16, #tpu.memory_space<vmem>>, vector<1x128x128xbf16>
    %51 = vector.shape_cast %50 : vector<1x128x128xbf16> to vector<128x128xbf16>
    %cst_23 = arith.constant dense<0.000000e+00> : vector<32x128xf32>
    %52 = tpu.matmul %48, %51, %cst_23 {dimension_numbers = #tpu.dot_dimension_numbers<[1], [0], [0], [1], [0, 0, 1, 1], [], []>} : vector<32x128xbf16>, vector<128x128xbf16>, vector<32x128xf32> -> vector<32x128xf32>
    %c1_24 = arith.constant 1 : index
    %c0_25 = arith.constant 0 : index
    %c0_26 = arith.constant 0 : index
    %53 = vector.load %arg3[%c1_24, %c0_25, %c0_26] : memref<3x128x128xbf16, #tpu.memory_space<vmem>>, vector<1x128x128xbf16>
    %54 = vector.shape_cast %53 : vector<1x128x128xbf16> to vector<128x128xbf16>
    %cst_27 = arith.constant dense<0.000000e+00> : vector<32x128xf32>
    %55 = tpu.matmul %48, %54, %cst_27 {dimension_numbers = #tpu.dot_dimension_numbers<[1], [0], [0], [1], [0, 0, 1, 1], [], []>} : vector<32x128xbf16>, vector<128x128xbf16>, vector<32x128xf32> -> vector<32x128xf32>
    %c2_28 = arith.constant 2 : index
    %c0_29 = arith.constant 0 : index
    %c0_30 = arith.constant 0 : index
    %56 = vector.load %arg3[%c2_28, %c0_29, %c0_30] : memref<3x128x128xbf16, #tpu.memory_space<vmem>>, vector<1x128x128xbf16>
    %57 = vector.shape_cast %56 : vector<1x128x128xbf16> to vector<128x128xbf16>
    %cst_31 = arith.constant dense<0.000000e+00> : vector<32x128xf32>
    %58 = tpu.matmul %48, %57, %cst_31 {dimension_numbers = #tpu.dot_dimension_numbers<[1], [0], [0], [1], [0, 0, 1, 1], [], []>} : vector<32x128xbf16>, vector<128x128xbf16>, vector<32x128xf32> -> vector<32x128xf32>
    %59 = vector.broadcast %49 : vector<1x128xf32> to vector<32x128xf32>
    %60 = arith.addf %55, %59 : vector<32x128xf32>
    %c1_i32_32 = arith.constant 1 : i32
    %61 = tpu.dynamic_rotate %52 by %c1_i32_32 dim 0 : vector<32x128xf32>, i32 -> vector<32x128xf32>
    %62 = vector.broadcast %20 : vector<32x1xf32> to vector<32x128xf32>
    %63 = arith.mulf %62, %61 : vector<32x128xf32>
    %64 = arith.addf %60, %63 : vector<32x128xf32>
    %c31_i32_33 = arith.constant 31 : i32
    %65 = tpu.dynamic_rotate %58 by %c31_i32_33 dim 0 : vector<32x128xf32>, i32 -> vector<32x128xf32>
    %66 = vector.broadcast %24 : vector<32x1xf32> to vector<32x128xf32>
    %67 = arith.mulf %66, %65 : vector<32x128xf32>
    %68 = arith.addf %64, %67 : vector<32x128xf32>
    %cst_34 = arith.constant 0.000000e+00 : f32
    %69 = vector.broadcast %cst_34 : f32 to vector<32x128xf32>
    %70 = arith.maximumf %68, %69 : vector<32x128xf32>
    %c0_35 = arith.constant 0 : index
    %c0_36 = arith.constant 0 : index
    %71 = vector.load %arg6[%c0_35, %c0_36] : memref<32x128xf32, #tpu.memory_space<vmem>>, vector<32x128xf32>
    tpu.vector_store %arg6[%c0_35, %c0_36], %70 {strides = array<i32>} : memref<32x128xf32, #tpu.memory_space<vmem>>, vector<32x128xf32>,
    return
  }
  func.func @transform_0(%arg0: i32) -> (i32, i32) {
    %c0_i32 = arith.constant 0 : i32
    %c0_i32_0 = arith.constant 0 : i32
    %c0_i32_1 = arith.constant 0 : i32
    return %c0_i32, %c0_i32_0 : i32, i32
  }
  func.func @transform_1(%arg0: i32) -> (i32, i32, i32) {
    %c0_i32 = arith.constant 0 : i32
    %c0_i32_0 = arith.constant 0 : i32
    %c0_i32_1 = arith.constant 0 : i32
    %c0_i32_2 = arith.constant 0 : i32
    return %c0_i32, %c0_i32_0, %c0_i32_1 : i32, i32, i32
  }
  func.func @transform_2(%arg0: i32) -> (i32, i32, i32) {
    %c0_i32 = arith.constant 0 : i32
    %c0_i32_0 = arith.constant 0 : i32
    %c0_i32_1 = arith.constant 0 : i32
    %c0_i32_2 = arith.constant 0 : i32
    return %c0_i32, %c0_i32_0, %c0_i32_1 : i32, i32, i32
  }
  func.func @transform_3(%arg0: i32) -> (i32, i32) {
    %c0_i32 = arith.constant 0 : i32
    %c0_i32_0 = arith.constant 0 : i32
    %c0_i32_1 = arith.constant 0 : i32
    return %c0_i32, %c0_i32_0 : i32, i32
  }
  func.func @transform_4(%arg0: i32) -> (i32, i32) {
    %c0_i32 = arith.constant 0 : i32
    %c0_i32_0 = arith.constant 0 : i32
    %c0_i32_1 = arith.constant 0 : i32
    return %c0_i32, %c0_i32_0 : i32, i32
  }
  func.func @transform_5(%arg0: i32) -> (i32, i32) {
    %c0_i32 = arith.constant 0 : i32
    %c0_i32_0 = arith.constant 0 : i32
    %c0_i32_1 = arith.constant 0 : i32
    return %c0_i32, %c0_i32_0 : i32, i32
  }
}

</mosaic_0001>

<llo_original>
// kernel: tile.13
$region0: #{tile.13}
  #allocation0 [shape = 's32[1]{0}', space=sflag, size = 0x4, scoped, tag = 'scoped memory for tile.13']
  %s0 = inlined_call_operand.vmem [shape: f32[8], index: 0, kind: input, shape index: {}]
  %s1 = inlined_call_operand.vmem [shape: f32[16,8], index: 1, kind: output, shape index: {}]
  // Predicated region
  $region2: #{tile.13} parent=0 // pred_check
    _
  $region3: #{tile.13} parent=0 // pred_check_branch
    %3 = sbr.rel (0) target = $region5
  $region4: #{tile.13} parent=0 // pred_region
    _
  $region5: #{tile.13} parent=0 // pred_fallthru
    _
  %v4 = vld [vmem:[%s0] ss:$0 sm:$0xff]
  %5 = vst [vmem:[%s1] sm:$0xff] %v4
  %s6 = scalar_lea.vmem %s1, 8
  %7 = vst [vmem:[%s6] sm:$0xff] %v4

// kernel: tile.14
$region0: #{tile.14}
  %s0 = inlined_call_operand.vmem [shape: f32[16,8], index: 0, kind: input, shape index: {}]
  %s1 = inlined_call_operand.vmem [shape: f32[1,128], index: 1, kind: output, shape index: {}]
  $region1: #{tile.14} parent=0
    #allocation0 [shape = 'u8[4096]{0}', space=vmem, size = 0x1000, scoped, tag = 'scoped mem for output reshape']
    %v2 = vld [vmem:[%s0] sm:$0x1]
    %vm3 = vcmask 64512
    %4 = vst.msk [vmem:[#allocation0] sm:$0x1] %vm3, %v2
    %s5 = scalar_lea.vmem %s0, 15
    %v6 = vld [vmem:[%s5] sm:$0x1]
    %7 = vrot.lane.b32.xlu0 %v6, 120
    %v8 = vpop.permute.xlu0 %7
    %vm9 = vcmask 1048512
    %10 = vst.msk [vmem:[#allocation0] sm:$0x1] %vm9, %v8
    %s11 = scalar_lea.vmem %s0, 14
    %v12 = vld [vmem:[%s11] sm:$0x1]
    %13 = vrot.lane.b32.xlu0 %v12, 112
    %v14 = vpop.permute.xlu0 %13
    %vm15 = vcmask 982912
    %16 = vst.msk [vmem:[#allocation0] sm:$0x1] %vm15, %v14
    %s17 = scalar_lea.vmem %s0, 13
    %v18 = vld [vmem:[%s17] sm:$0x1]
    %19 = vrot.lane.b32.xlu0 %v18, 104
    %v20 = vpop.permute.xlu0 %19
    %vm21 = vcmask 917312
    %22 = vst.msk [vmem:[#allocation0] sm:$0x1] %vm21, %v20
    %s23 = scalar_lea.vmem %s0, 12
    %v24 = vld [vmem:[%s23] sm:$0x1]
    %25 = vrot.lane.b32.xlu0 %v24, 96
    %v26 = vpop.permute.xlu0 %25
    %vm27 = vcmask 851712
    %28 = vst.msk [vmem:[#allocation0] sm:$0x1] %vm27, %v26
    %s29 = scalar_lea.vmem %s0, 11
    %v30 = vld [vmem:[%s29] sm:$0x1]
    %31 = vrot.lane.b32.xlu0 %v30, 88
    %v32 = vpop.permute.xlu0 %31
    %vm33 = vcmask 786112
    %34 = vst.msk [vmem:[#allocation0] sm:$0x1] %vm33, %v32
    %s35 = scalar_lea.vmem %s0, 10
    %v36 = vld [vmem:[%s35] sm:$0x1]
    %37 = vrot.lane.b32.xlu0 %v36, 80
    %v38 = vpop.permute.xlu0 %37
    %vm39 = vcmask 720512
    %40 = vst.msk [vmem:[#allocation0] sm:$0x1] %vm39, %v38
    %s41 = scalar_lea.vmem %s0, 9
    %v42 = vld [vmem:[%s41] sm:$0x1]
    %43 = vrot.lane.b32.xlu0 %v42, 72
    %v44 = vpop.permute.xlu0 %43
    %vm45 = vcmask 654912
    %46 = vst.msk [vmem:[#allocation0] sm:$0x1] %vm45, %v44
    %s47 = scalar_lea.vmem %s0, 8
    %v48 = vld [vmem:[%s47] sm:$0x1]
    %49 = vrot.lane.b32.xlu0 %v48, 64
    %v50 = vpop.permute.xlu0 %49
    %vm51 = vcmask 589312
    %52 = vst.msk [vmem:[#allocation0] sm:$0x1] %vm51, %v50
    %s53 = scalar_lea.vmem %s0, 7
    %v54 = vld [vmem:[%s53] sm:$0x1]
    %55 = vrot.lane.b32.xlu0 %v54, 56
    %v56 = vpop.permute.xlu0 %55
    %vm57 = vcmask 523712
    %58 = vst.msk [vmem:[#allocation0] sm:$0x1] %vm57, %v56
    %s59 = scalar_lea.vmem %s0, 6
    %v60 = vld [vmem:[%s59] sm:$0x1]
    %61 = vrot.lane.b32.xlu0 %v60, 48
    %v62 = vpop.permute.xlu0 %61
    %vm63 = vcmask 458112
    %64 = vst.msk [vmem:[#allocation0] sm:$0x1] %vm63, %v62
    %s65 = scalar_lea.vmem %s0, 5
    %v66 = vld [vmem:[%s65] sm:$0x1]
    %67 = vrot.lane.b32.xlu0 %v66, 40
    %v68 = vpop.permute.xlu0 %67
    %vm69 = vcmask 392512
    %70 = vst.msk [vmem:[#allocation0] sm:$0x1] %vm69, %v68
    %s71 = scalar_lea.vmem %s0, 4
    %v72 = vld [vmem:[%s71] sm:$0x1]
    %73 = vrot.lane.b32.xlu0 %v72, 32
    %v74 = vpop.permute.xlu0 %73
    %vm75 = vcmask 326912
    %76 = vst.msk [vmem:[#allocation0] sm:$0x1] %vm75, %v74
    %s77 = scalar_lea.vmem %s0, 3
    %v78 = vld [vmem:[%s77] sm:$0x1]
    %79 = vrot.lane.b32.xlu0 %v78, 24
    %v80 = vpop.permute.xlu0 %79
    %vm81 = vcmask 261312
    %82 = vst.msk [vmem:[#allocation0] sm:$0x1] %vm81, %v80
    %s83 = scalar_lea.vmem %s0, 2
    %v84 = vld [vmem:[%s83] sm:$0x1]
    %85 = vrot.lane.b32.xlu0 %v84, 16
    %v86 = vpop.permute.xlu0 %85
    %vm87 = vcmask 195712
    %88 = vst.msk [vmem:[#allocation0] sm:$0x1] %vm87, %v86
    %s89 = scalar_lea.vmem %s0, 1
    %v90 = vld [vmem:[%s89] sm:$0x1]
    %91 = vrot.lane.b32.xlu0 %v90, 8
    %v92 = vpop.permute.xlu0 %91
    %vm93 = vcmask 130112
    %94 = vst.msk [vmem:[#allocation0] sm:$0x1] %vm93, %v92
    %s96 = sshllo.u32 0, 1
    %v98 = vld [vmem:[#allocation0] sm:%s96]
    %s99 = sshllo.u32 0, 1
    %100 = vst [vmem:[%s1] sm:%s99] %v98

// kernel: double_conv2d.1
$region0: #{double_conv2d.1}
  #allocation0 [shape = 'u32[]', space=smem, size = 0x4, offset = 0x4, fixed_abs, tag = 'smem constant byte address 0x4 - core index']
  #allocation1 [shape = 'u32[144,128]{1,0:T(1,128)}', space=vmem, size = 0x12000, scoped, tag = 'internal scratch']
  %s0 = inlined_call_operand.vmem [shape: bf16[32,64], index: 0, kind: input, shape index: {}]
  %s1 = inlined_call_operand.vmem [shape: bf16[3,64,128], index: 1, kind: input, shape index: {}]
  %s2 = inlined_call_operand.vmem [shape: bf16[3,128,128], index: 2, kind: input, shape index: {}]
  %s3 = inlined_call_operand.vmem [shape: f32[1,128], index: 3, kind: input, shape index: {}]
  %s4 = inlined_call_operand.vmem [shape: f32[1,128], index: 4, kind: input, shape index: {}]
  %s5 = inlined_call_operand.vmem [shape: f32[32,128], index: 5, kind: output, shape index: {}]
  %s6 = sld [smem:[#allocation0]]
  $region30: #{double_conv2d.1} parent=0
    _
  %s8 = ssub.s32 1, %s6
  %s9 = scalar_select 0, %s8, %s6
  // Predicated region
  $region2: #{double_conv2d.1} parent=0 // pred_check
    _
  $region3: #{double_conv2d.1} parent=0 // pred_check_branch
    %11 = sbr.rel (0) target = $region5
  $region4: #{double_conv2d.1} parent=0 // pred_region
    _
  $region5: #{double_conv2d.1} parent=0 // pred_fallthru
    _
  // Predicated region
  $region6: #{double_conv2d.1} parent=0 // pred_check
    _
  $region7: #{double_conv2d.1} parent=0 // pred_check_branch
    %13 = sbr.rel (0) target = $region9
  $region8: #{double_conv2d.1} parent=0 // pred_region
    _
  $region9: #{double_conv2d.1} parent=0 // pred_fallthru
    _
  // Predicated region
  $region10: #{double_conv2d.1} parent=0 // pred_check
    _
  $region11: #{double_conv2d.1} parent=0 // pred_check_branch
    %15 = sbr.rel (0) target = $region13
  $region12: #{double_conv2d.1} parent=0 // pred_region
    _
  $region13: #{double_conv2d.1} parent=0 // pred_fallthru
    _
  // Predicated region
  $region14: #{double_conv2d.1} parent=0 // pred_check
    _
  $region15: #{double_conv2d.1} parent=0 // pred_check_branch
    %17 = sbr.rel (0) target = $region17
  $region16: #{double_conv2d.1} parent=0 // pred_region
    _
  $region17: #{double_conv2d.1} parent=0 // pred_fallthru
    _
  // Predicated region
  $region18: #{double_conv2d.1} parent=0 // pred_check
    _
  $region19: #{double_conv2d.1} parent=0 // pred_check_branch
    %19 = sbr.rel (0) target = $region21
  $region20: #{double_conv2d.1} parent=0 // pred_region
    _
  $region21: #{double_conv2d.1} parent=0 // pred_fallthru
    _
  %v21 = vlaneseq
  %v22 = vshrl.u32 %v21, 7
  %v23 = vadd.s32 %v22, 8
  %v24 = vadd.s32 %v22, 16
  %v25 = vadd.s32 %v22, 24
  %vm26 = vcmp.lt.s32.totalorder %v22, 0
  %v27 = vsub.s32 0, %v22
  %v28 = vsel %vm26, %v27, %v22
  %v29 = vshrl.u32 %v28, 4
  %v30 = vand.u32 %v28, 15
  %v31 = vsub.s32 0, %v30
  %v32 = vsel %vm26, %v31, %v30
  %vm33 = vcmp.lt.s32.totalorder %v23, 0
  %v34 = vsub.s32 0, %v23
  %v35 = vsel %vm33, %v34, %v23
  %v36 = vshrl.u32 %v35, 4
  %v37 = vand.u32 %v35, 15
  %v38 = vsub.s32 0, %v37
  %v39 = vsel %vm33, %v38, %v37
  %vm40 = vcmp.lt.s32.totalorder %v24, 0
  %v41 = vsub.s32 0, %v24
  %v42 = vsel %vm40, %v41, %v24
  %v43 = vshrl.u32 %v42, 4
  %v44 = vand.u32 %v42, 15
  %v45 = vsub.s32 0, %v44
  %v46 = vsel %vm40, %v45, %v44
  %vm47 = vcmp.lt.s32.totalorder %v25, 0
  %v48 = vsub.s32 0, %v25
  %v49 = vsel %vm47, %v48, %v25
  %v50 = vshrl.u32 %v49, 4
  %v51 = vand.u32 %v49, 15
  %v52 = vsub.s32 0, %v51
  %v53 = vsel %vm47, %v52, %v51
  %vm54 = vcmp.ne.s32.totalorder %v32, 0
  %vm55 = vcmp.ne.s32.totalorder %v39, 0
  %vm56 = vcmp.ne.s32.totalorder %v46, 0
  %vm57 = vcmp.ne.s32.totalorder %v53, 0
  %vm58 = vcmp.lt.s32.totalorder %v32, 0
  %vm59 = vcmp.lt.s32.totalorder %v39, 0
  %vm60 = vcmp.lt.s32.totalorder %v46, 0
  %vm61 = vcmp.lt.s32.totalorder %v53, 0
  %vm62 = vmand %vm58, %vm54
  %vm63 = vmand %vm59, %vm55
  %vm64 = vmand %vm60, %vm56
  %vm65 = vmand %vm61, %vm57
  %v66 = vadd.s32 %v32, 16
  %v67 = vadd.s32 %v39, 16
  %v68 = vadd.s32 %v46, 16
  %v69 = vadd.s32 %v53, 16
  %v70 = vsel %vm62, %v66, %v32
  %v71 = vsel %vm63, %v67, %v39
  %v72 = vsel %vm64, %v68, %v46
  %v73 = vsel %vm65, %v69, %v53
  %vm74 = vcmp.ne.s32.totalorder %v70, 0
  %vm75 = vcmp.ne.s32.totalorder %v71, 0
  %vm76 = vcmp.ne.s32.totalorder %v72, 0
  %vm77 = vcmp.ne.s32.totalorder %v73, 0
  %v78 = vsel %vm74, 1, 0
  %v79 = vsel %vm75, 1, 0
  %v80 = vsel %vm76, 1, 0
  %v81 = vsel %vm77, 1, 0
  %v82 = vcvt.s32.f32 %v78
  %v83 = vcvt.s32.f32 %v79
  %v84 = vcvt.s32.f32 %v80
  %v85 = vcvt.s32.f32 %v81
  %vm86 = vcmp.ne.s32.totalorder %v70, 15
  %vm87 = vcmp.ne.s32.totalorder %v71, 15
  %vm88 = vcmp.ne.s32.totalorder %v72, 15
  %vm89 = vcmp.ne.s32.totalorder %v73, 15
  %v90 = vsel %vm86, 1, 0
  %v91 = vsel %vm87, 1, 0
  %v92 = vsel %vm88, 1, 0
  %v93 = vsel %vm89, 1, 0
  %v94 = vcvt.s32.f32 %v90
  %v95 = vcvt.s32.f32 %v91
  %v96 = vcvt.s32.f32 %v92
  %v97 = vcvt.s32.f32 %v93
  %v98 = vld [vmem:[%s0] sm:$0xf]
  %v99 = vld [vmem:[%s0 + $0x4] sm:$0xf]
  %v100 = vld [vmem:[%s0 + $0x8] sm:$0xf]
  %v101 = vld [vmem:[%s0 + $0xc] sm:$0xf]
  %v102 = vld [vmem:[%s3] sm:$0x1]
  %v103 = vld [vmem:[%s1] sm:$0xf]
  %v104 = vld [vmem:[%s1 + $0x4] sm:$0xf]
  %v105 = vld [vmem:[%s1 + $0x8] sm:$0xf]
  %v106 = vld [vmem:[%s1 + $0xc] sm:$0xf]
  %v107 = vld [vmem:[%s1 + $0x10] sm:$0xf]
  %v108 = vld [vmem:[%s1 + $0x14] sm:$0xf]
  %v109 = vld [vmem:[%s1 + $0x18] sm:$0xf]
  %v110 = vld [vmem:[%s1 + $0x1c] sm:$0xf]
  %v115 = vunpack.c.l.b16 %v98
  %v116 = vunpack.c.l.b16 %v99
  %v117 = vunpack.c.l.b16 %v100
  %v118 = vunpack.c.l.b16 %v101
  %v119 = vpack.c.b16 %v116, %v115
  %v120 = vpack.c.b16 %v118, %v117
  %v129 = vunpack.c.l.b16 %v103
  %v130 = vunpack.c.l.b16 %v104
  %v131 = vunpack.c.l.b16 %v105
  %v132 = vunpack.c.l.b16 %v106
  %v133 = vunpack.c.l.b16 %v107
  %v134 = vunpack.c.l.b16 %v108
  %v135 = vunpack.c.l.b16 %v109
  %v136 = vunpack.c.l.b16 %v110
  %v137 = vpack.c.b16 %v130, %v129
  %v138 = vpack.c.b16 %v132, %v131
  %v139 = vpack.c.b16 %v134, %v133
  %v140 = vpack.c.b16 %v136, %v135
  %vm145 = vcmask 523264
  %v147 = vsel %vm145, %v119, 0
  %v150 = vsel %vm145, %v120, 0
  %152 = vmatprep.subr.bf16.mxu0 0
  %153 = vmatpush1.bf16.msra.mxu0 %v137
  %154 = vmatprep.subr.bf16.mxu0 0
  %155 = vmatpush1.bf16.msra.mxu0 %v138
  %156 = vmatprep.subr.bf16.mxu0 0
  %157 = vmatpush1.bf16.msra.mxu0 %v139
  %158 = vmatprep.subr.bf16.mxu0 0
  %159 = vmatpush1.bf16.msra.mxu0 %v140
  %160 = vmatprep.subr.bf16.mxu0 0
  %161 = vmatpush1.bf16.msra.mxu0 0
  %162 = vmatprep.subr.bf16.mxu0 0
  %163 = vmatpush1.bf16.msra.mxu0 0
  %164 = vmatprep.subr.bf16.mxu0 0
  %165 = vmatpush1.bf16.msra.mxu0 0
  %166 = vmatprep.subr.bf16.mxu0 0
  %167 = vmatpush1.bf16.msra.mxu0 0
  %168 = vmatprep.subr.bf16.mxu0 0
  %169 = vmatpush1.bf16.msra.mxu0 0
  %170 = vmatprep.subr.bf16.mxu0 0
  %171 = vmatpush1.bf16.msra.mxu0 0
  %172 = vmatprep.subr.bf16.mxu0 0
  %173 = vmatpush1.bf16.msra.mxu0 0
  %174 = vmatprep.subr.bf16.mxu0 0
  %175 = vmatpush1.bf16.msra.mxu0 0
  %176 = vmatprep.subr.bf16.mxu0 0
  %177 = vmatpush1.bf16.msra.mxu0 0
  %178 = vmatprep.subr.bf16.mxu0 0
  %179 = vmatpush1.bf16.msra.mxu0 0
  %180 = vmatprep.subr.bf16.mxu0 0
  %181 = vmatpush1.bf16.msra.mxu0 0
  %182 = vmatprep.subr.bf16.mxu0 0
  %183 = vmatpush1.bf16.msra.mxu0 0
  %184 = vmatprep.mubr.bf16.mxu0 0
  %185 = vmatmul.mubr.bf16.gmra.mrb[0].mxu0 %v147
  %v186 = vpop.f32.mrb[0].mxu0
  %v187 = vadd.f32 0.0, %v186
  %v188 = vpop.f32.mrb[0].mxu0
  %v189 = vpop.f32.mrb[0].mxu0
  %v190 = vadd.f32 0.0, %v189
  %v191 = vpop.f32.mrb[0].mxu0
  %192 = vmatprep.mubr.bf16.mxu0 0
  %193 = vmatmul.mubr.bf16.gmra.mrb[0].mxu0 %v150
  %v194 = vpop.f32.mrb[0].mxu0
  %v195 = vadd.f32 0.0, %v194
  %v196 = vpop.f32.mrb[0].mxu0
  %v197 = vpop.f32.mrb[0].mxu0
  %v198 = vadd.f32 0.0, %v197
  %v199 = vpop.f32.mrb[0].mxu0
  %200 = vdwg.mxu0
  %s201 = scalar_lea.vmem %s1, 32
  %v202 = vld [vmem:[%s201] sm:$0xf]
  %v203 = vld [vmem:[%s201 + $0x4] sm:$0xf]
  %v204 = vld [vmem:[%s201 + $0x8] sm:$0xf]
  %v205 = vld [vmem:[%s201 + $0xc] sm:$0xf]
  %v206 = vld [vmem:[%s201 + $0x10] sm:$0xf]
  %v207 = vld [vmem:[%s201 + $0x14] sm:$0xf]
  %v208 = vld [vmem:[%s201 + $0x18] sm:$0xf]
  %v209 = vld [vmem:[%s201 + $0x1c] sm:$0xf]
  %s210 = scalar_lea.vmem %s1, 64
  %v211 = vld [vmem:[%s210] sm:$0xf]
  %v212 = vld [vmem:[%s210 + $0x4] sm:$0xf]
  %v213 = vld [vmem:[%s210 + $0x8] sm:$0xf]
  %v214 = vld [vmem:[%s210 + $0xc] sm:$0xf]
  %v215 = vld [vmem:[%s210 + $0x10] sm:$0xf]
  %v216 = vld [vmem:[%s210 + $0x14] sm:$0xf]
  %v217 = vld [vmem:[%s210 + $0x18] sm:$0xf]
  %v218 = vld [vmem:[%s210 + $0x1c] sm:$0xf]
  %v227 = vunpack.c.l.b16 %v211
  %v228 = vunpack.c.l.b16 %v212
  %v229 = vunpack.c.l.b16 %v213
  %v230 = vunpack.c.l.b16 %v214
  %v231 = vunpack.c.l.b16 %v215
  %v232 = vunpack.c.l.b16 %v216
  %v233 = vunpack.c.l.b16 %v217
  %v234 = vunpack.c.l.b16 %v218
  %v235 = vpack.c.b16 %v228, %v227
  %v236 = vpack.c.b16 %v230, %v229
  %v237 = vpack.c.b16 %v232, %v231
  %v238 = vpack.c.b16 %v234, %v233
  %243 = vmatprep.subr.bf16.mxu0 0
  %244 = vmatpush1.bf16.msra.mxu0 %v235
  %245 = vmatprep.subr.bf16.mxu0 0
  %246 = vmatpush1.bf16.msra.mxu0 %v236
  %247 = vmatprep.subr.bf16.mxu0 0
  %248 = vmatpush1.bf16.msra.mxu0 %v237
  %249 = vmatprep.subr.bf16.mxu0 0
  %250 = vmatpush1.bf16.msra.mxu0 %v238
  %251 = vmatprep.subr.bf16.mxu0 0
  %252 = vmatpush1.bf16.msra.mxu0 0
  %253 = vmatprep.subr.bf16.mxu0 0
  %254 = vmatpush1.bf16.msra.mxu0 0
  %255 = vmatprep.subr.bf16.mxu0 0
  %256 = vmatpush1.bf16.msra.mxu0 0
  %257 = vmatprep.subr.bf16.mxu0 0
  %258 = vmatpush1.bf16.msra.mxu0 0
  %259 = vmatprep.subr.bf16.mxu0 0
  %260 = vmatpush1.bf16.msra.mxu0 0
  %261 = vmatprep.subr.bf16.mxu0 0
  %262 = vmatpush1.bf16.msra.mxu0 0
  %263 = vmatprep.subr.bf16.mxu0 0
  %264 = vmatpush1.bf16.msra.mxu0 0
  %265 = vmatprep.subr.bf16.mxu0 0
  %266 = vmatpush1.bf16.msra.mxu0 0
  %267 = vmatprep.subr.bf16.mxu0 0
  %268 = vmatpush1.bf16.msra.mxu0 0
  %269 = vmatprep.subr.bf16.mxu0 0
  %270 = vmatpush1.bf16.msra.mxu0 0
  %271 = vmatprep.subr.bf16.mxu0 0
  %272 = vmatpush1.bf16.msra.mxu0 0
  %273 = vmatprep.subr.bf16.mxu0 0
  %274 = vmatpush1.bf16.msra.mxu0 0
  %275 = vmatprep.mubr.bf16.mxu0 0
  %276 = vmatmul.mubr.bf16.gmra.mrb[0].mxu0 %v147
  %v277 = vpop.f32.mrb[0].mxu0
  %v278 = vadd.f32 0.0, %v277
  %v279 = vpop.f32.mrb[0].mxu0
  %v280 = vpop.f32.mrb[0].mxu0
  %v281 = vadd.f32 0.0, %v280
  %v282 = vpop.f32.mrb[0].mxu0
  %283 = vmatprep.mubr.bf16.mxu0 0
  %284 = vmatmul.mubr.bf16.gmra.mrb[0].mxu0 %v150
  %v285 = vpop.f32.mrb[0].mxu0
  %v286 = vadd.f32 0.0, %v285
  %v287 = vpop.f32.mrb[0].mxu0
  %v288 = vpop.f32.mrb[0].mxu0
  %v289 = vadd.f32 0.0, %v288
  %v290 = vpop.f32.mrb[0].mxu0
  %291 = vdwg.mxu0
  %v293 = vlaneseq
  %v294 = vshrl.u32 %v293, 7
  %v295 = vsub.s32 0, %v294
  %v296 = vrot.slane %v102, %v295
  %v306 = vunpack.c.l.b16 %v202
  %v307 = vunpack.c.l.b16 %v203
  %v308 = vunpack.c.l.b16 %v204
  %v309 = vunpack.c.l.b16 %v205
  %v310 = vunpack.c.l.b16 %v206
  %v311 = vunpack.c.l.b16 %v207
  %v312 = vunpack.c.l.b16 %v208
  %v313 = vunpack.c.l.b16 %v209
  %v314 = vpack.c.b16 %v307, %v306
  %v315 = vpack.c.b16 %v309, %v308
  %v316 = vpack.c.b16 %v311, %v310
  %v317 = vpack.c.b16 %v313, %v312
  %322 = vmatprep.subr.bf16.mxu0 0
  %323 = vmatpush1.bf16.msra.mxu0 %v314
  %324 = vmatprep.subr.bf16.mxu0 0
  %325 = vmatpush1.bf16.msra.mxu0 %v315
  %326 = vmatprep.subr.bf16.mxu0 0
  %327 = vmatpush1.bf16.msra.mxu0 %v316
  %328 = vmatprep.subr.bf16.mxu0 0
  %329 = vmatpush1.bf16.msra.mxu0 %v317
  %330 = vmatprep.subr.bf16.mxu0 0
  %331 = vmatpush1.bf16.msra.mxu0 0
  %332 = vmatprep.subr.bf16.mxu0 0
  %333 = vmatpush1.bf16.msra.mxu0 0
  %334 = vmatprep.subr.bf16.mxu0 0
  %335 = vmatpush1.bf16.msra.mxu0 0
  %336 = vmatprep.subr.bf16.mxu0 0
  %337 = vmatpush1.bf16.msra.mxu0 0
  %338 = vmatprep.subr.bf16.mxu0 0
  %339 = vmatpush1.bf16.msra.mxu0 0
  %340 = vmatprep.subr.bf16.mxu0 0
  %341 = vmatpush1.bf16.msra.mxu0 0
  %342 = vmatprep.subr.bf16.mxu0 0
  %343 = vmatpush1.bf16.msra.mxu0 0
  %344 = vmatprep.subr.bf16.mxu0 0
  %345 = vmatpush1.bf16.msra.mxu0 0
  %346 = vmatprep.subr.bf16.mxu0 0
  %347 = vmatpush1.bf16.msra.mxu0 0
  %348 = vmatprep.subr.bf16.mxu0 0
  %349 = vmatpush1.bf16.msra.mxu0 0
  %350 = vmatprep.subr.bf16.mxu0 0
  %351 = vmatpush1.bf16.msra.mxu0 0
  %352 = vmatprep.subr.bf16.mxu0 0
  %353 = vmatpush1.bf16.msra.mxu0 0
  %354 = vmatprep.mubr.bf16.mxu0 0
  %355 = vmatmul.mubr.bf16.gmra.mrb[0].mxu0 %v147
  %v356 = vpop.f32.mrb[0].mxu0
  %v357 = vadd.f32 %v296, %v356
  %v358 = vpop.f32.mrb[0].mxu0
  %v359 = vpop.f32.mrb[0].mxu0
  %v360 = vadd.f32 %v296, %v359
  %v361 = vpop.f32.mrb[0].mxu0
  %362 = vmatprep.mubr.bf16.mxu0 0
  %363 = vmatmul.mubr.bf16.gmra.mrb[0].mxu0 %v150
  %v364 = vpop.f32.mrb[0].mxu0
  %v365 = vadd.f32 %v296, %v364
  %v366 = vpop.f32.mrb[0].mxu0
  %v367 = vpop.f32.mrb[0].mxu0
  %v368 = vadd.f32 %v296, %v367
  %v369 = vpop.f32.mrb[0].mxu0
  %370 = vdwg.mxu0
  %v371 = vrot.slane %v187, 7
  %v372 = vrot.slane %v190, 7
  %v373 = vrot.slane %v195, 7
  %v374 = vrot.slane %v198, 7
  %vm375 = vcmp.lt.s32.totalorder %v22, 1
  %v376 = vsel %vm375, %v373, %v374
  %v377 = vsel %vm375, %v372, %v373
  %v378 = vsel %vm375, %v371, %v372
  %v379 = vsel %vm375, %v374, %v371
  %v380 = vmul.f32 %v82, %v379
  %v381 = vmul.f32 %v83, %v378
  %v382 = vmul.f32 %v84, %v377
  %v383 = vmul.f32 %v85, %v376
  %v384 = vadd.f32 %v357, %v380
  %v385 = vadd.f32 %v360, %v381
  %v386 = vadd.f32 %v365, %v382
  %v387 = vadd.f32 %v368, %v383
  %v388 = vrot.slane %v278, 1
  %v389 = vrot.slane %v281, 1
  %v390 = vrot.slane %v286, 1
  %v391 = vrot.slane %v289, 1
  %vm392 = vcmp.lt.s32.totalorder %v22, 7
  %v393 = vsel %vm392, %v390, %v391
  %v394 = vsel %vm392, %v389, %v390
  %v395 = vsel %vm392, %v388, %v389
  %v396 = vsel %vm392, %v391, %v388
  %v397 = vmul.f32 %v94, %v395
  %v398 = vmul.f32 %v95, %v394
  %v399 = vmul.f32 %v96, %v393
  %v400 = vmul.f32 %v97, %v396
  %v401 = vadd.f32 %v384, %v397
  %v402 = vadd.f32 %v385, %v398
  %v403 = vadd.f32 %v386, %v399
  %v404 = vadd.f32 %v387, %v400
  %v405 = vmax.f32 %v401, 0.0
  %v406 = vmax.f32 %v402, 0.0
  %v407 = vmax.f32 %v403, 0.0
  %v408 = vmax.f32 %v404, 0.0
  %v409 = vpack.c.bf16 %v406, %v405
  %v410 = vpack.c.bf16 %v408, %v407
  %v411 = vld [vmem:[%s4] sm:$0x1]
  %v412 = vld [vmem:[%s2] sm:$0xf]
  %v413 = vld [vmem:[%s2 + $0x4] sm:$0xf]
  %v414 = vld [vmem:[%s2 + $0x8] sm:$0xf]
  %v415 = vld [vmem:[%s2 + $0xc] sm:$0xf]
  %v416 = vld [vmem:[%s2 + $0x10] sm:$0xf]
  %v417 = vld [vmem:[%s2 + $0x14] sm:$0xf]
  %v418 = vld [vmem:[%s2 + $0x18] sm:$0xf]
  %v419 = vld [vmem:[%s2 + $0x1c] sm:$0xf]
  %v420 = vld [vmem:[%s2 + $0x20] sm:$0xf]
  %v421 = vld [vmem:[%s2 + $0x24] sm:$0xf]
  %v422 = vld [vmem:[%s2 + $0x28] sm:$0xf]
  %v423 = vld [vmem:[%s2 + $0x2c] sm:$0xf]
  %v424 = vld [vmem:[%s2 + $0x30] sm:$0xf]
  %v425 = vld [vmem:[%s2 + $0x34] sm:$0xf]
  %v426 = vld [vmem:[%s2 + $0x38] sm:$0xf]
  %v427 = vld [vmem:[%s2 + $0x3c] sm:$0xf]
  %v444 = vunpack.c.l.b16 %v412
  %v445 = vunpack.c.l.b16 %v413
  %v446 = vunpack.c.l.b16 %v414
  %v447 = vunpack.c.l.b16 %v415
  %v448 = vunpack.c.l.b16 %v416
  %v449 = vunpack.c.l.b16 %v417
  %v450 = vunpack.c.l.b16 %v418
  %v451 = vunpack.c.l.b16 %v419
  %v452 = vunpack.c.l.b16 %v420
  %v453 = vunpack.c.l.b16 %v421
  %v454 = vunpack.c.l.b16 %v422
  %v455 = vunpack.c.l.b16 %v423
  %v456 = vunpack.c.l.b16 %v424
  %v457 = vunpack.c.l.b16 %v425
  %v458 = vunpack.c.l.b16 %v426
  %v459 = vunpack.c.l.b16 %v427
  %v460 = vpack.c.b16 %v445, %v444
  %v461 = vpack.c.b16 %v447, %v446
  %v462 = vpack.c.b16 %v449, %v448
  %v463 = vpack.c.b16 %v451, %v450
  %v464 = vpack.c.b16 %v453, %v452
  %v465 = vpack.c.b16 %v455, %v454
  %v466 = vpack.c.b16 %v457, %v456
  %v467 = vpack.c.b16 %v459, %v458
  %476 = vmatprep.subr.bf16.mxu0 0
  %477 = vmatpush1.bf16.msra.mxu0 %v460
  %478 = vmatprep.subr.bf16.mxu0 0
  %479 = vmatpush1.bf16.msra.mxu0 %v461
  %480 = vmatprep.subr.bf16.mxu0 0
  %481 = vmatpush1.bf16.msra.mxu0 %v462
  %482 = vmatprep.subr.bf16.mxu0 0
  %483 = vmatpush1.bf16.msra.mxu0 %v463
  %484 = vmatprep.subr.bf16.mxu0 0
  %485 = vmatpush1.bf16.msra.mxu0 %v464
  %486 = vmatprep.subr.bf16.mxu0 0
  %487 = vmatpush1.bf16.msra.mxu0 %v465
  %488 = vmatprep.subr.bf16.mxu0 0
  %489 = vmatpush1.bf16.msra.mxu0 %v466
  %490 = vmatprep.subr.bf16.mxu0 0
  %491 = vmatpush1.bf16.msra.mxu0 %v467
  %492 = vmatprep.subr.bf16.mxu0 0
  %493 = vmatpush1.bf16.msra.mxu0 0
  %494 = vmatprep.subr.bf16.mxu0 0
  %495 = vmatpush1.bf16.msra.mxu0 0
  %496 = vmatprep.subr.bf16.mxu0 0
  %497 = vmatpush1.bf16.msra.mxu0 0
  %498 = vmatprep.subr.bf16.mxu0 0
  %499 = vmatpush1.bf16.msra.mxu0 0
  %500 = vmatprep.subr.bf16.mxu0 0
  %501 = vmatpush1.bf16.msra.mxu0 0
  %502 = vmatprep.subr.bf16.mxu0 0
  %503 = vmatpush1.bf16.msra.mxu0 0
  %504 = vmatprep.subr.bf16.mxu0 0
  %505 = vmatpush1.bf16.msra.mxu0 0
  %506 = vmatprep.subr.bf16.mxu0 0
  %507 = vmatpush1.bf16.msra.mxu0 0
  %508 = vmatprep.mubr.bf16.mxu0 0
  %509 = vmatmul.mubr.bf16.gmra.mrb[0].mxu0 %v409
  %v510 = vpop.f32.mrb[0].mxu0
  %v511 = vadd.f32 0.0, %v510
  %v512 = vpop.f32.mrb[0].mxu0
  %v513 = vpop.f32.mrb[0].mxu0
  %v514 = vadd.f32 0.0, %v513
  %v515 = vpop.f32.mrb[0].mxu0
  %516 = vmatprep.mubr.bf16.mxu0 0
  %517 = vmatmul.mubr.bf16.gmra.mrb[0].mxu0 %v410
  %v518 = vpop.f32.mrb[0].mxu0
  %v519 = vadd.f32 0.0, %v518
  %v520 = vpop.f32.mrb[0].mxu0
  %v521 = vpop.f32.mrb[0].mxu0
  %v522 = vadd.f32 0.0, %v521
  %v523 = vpop.f32.mrb[0].mxu0
  %524 = vdwg.mxu0
  %s525 = scalar_lea.vmem %s2, 64
  %v526 = vld [vmem:[%s525] sm:$0xf]
  %v527 = vld [vmem:[%s525 + $0x4] sm:$0xf]
  %v528 = vld [vmem:[%s525 + $0x8] sm:$0xf]
  %v529 = vld [vmem:[%s525 + $0xc] sm:$0xf]
  %v530 = vld [vmem:[%s525 + $0x10] sm:$0xf]
  %v531 = vld [vmem:[%s525 + $0x14] sm:$0xf]
  %v532 = vld [vmem:[%s525 + $0x18] sm:$0xf]
  %v533 = vld [vmem:[%s525 + $0x1c] sm:$0xf]
  %v534 = vld [vmem:[%s525 + $0x20] sm:$0xf]
  %v535 = vld [vmem:[%s525 + $0x24] sm:$0xf]
  %v536 = vld [vmem:[%s525 + $0x28] sm:$0xf]
  %v537 = vld [vmem:[%s525 + $0x2c] sm:$0xf]
  %v538 = vld [vmem:[%s525 + $0x30] sm:$0xf]
  %v539 = vld [vmem:[%s525 + $0x34] sm:$0xf]
  %v540 = vld [vmem:[%s525 + $0x38] sm:$0xf]
  %v541 = vld [vmem:[%s525 + $0x3c] sm:$0xf]
  %s542 = scalar_lea.vmem %s2, 128
  %v543 = vld [vmem:[%s542] sm:$0xf]
  %v544 = vld [vmem:[%s542 + $0x4] sm:$0xf]
  %v545 = vld [vmem:[%s542 + $0x8] sm:$0xf]
  %v546 = vld [vmem:[%s542 + $0xc] sm:$0xf]
  %v547 = vld [vmem:[%s542 + $0x10] sm:$0xf]
  %v548 = vld [vmem:[%s542 + $0x14] sm:$0xf]
  %v549 = vld [vmem:[%s542 + $0x18] sm:$0xf]
  %v550 = vld [vmem:[%s542 + $0x1c] sm:$0xf]
  %v551 = vld [vmem:[%s542 + $0x20] sm:$0xf]
  %v552 = vld [vmem:[%s542 + $0x24] sm:$0xf]
  %v553 = vld [vmem:[%s542 + $0x28] sm:$0xf]
  %v554 = vld [vmem:[%s542 + $0x2c] sm:$0xf]
  %v555 = vld [vmem:[%s542 + $0x30] sm:$0xf]
  %v556 = vld [vmem:[%s542 + $0x34] sm:$0xf]
  %v557 = vld [vmem:[%s542 + $0x38] sm:$0xf]
  %v558 = vld [vmem:[%s542 + $0x3c] sm:$0xf]
  %v575 = vunpack.c.l.b16 %v543
  %v576 = vunpack.c.l.b16 %v544
  %v577 = vunpack.c.l.b16 %v545
  %v578 = vunpack.c.l.b16 %v546
  %v579 = vunpack.c.l.b16 %v547
  %v580 = vunpack.c.l.b16 %v548
  %v581 = vunpack.c.l.b16 %v549
  %v582 = vunpack.c.l.b16 %v550
  %v583 = vunpack.c.l.b16 %v551
  %v584 = vunpack.c.l.b16 %v552
  %v585 = vunpack.c.l.b16 %v553
  %v586 = vunpack.c.l.b16 %v554
  %v587 = vunpack.c.l.b16 %v555
  %v588 = vunpack.c.l.b16 %v556
  %v589 = vunpack.c.l.b16 %v557
  %v590 = vunpack.c.l.b16 %v558
  %v591 = vpack.c.b16 %v576, %v575
  %v592 = vpack.c.b16 %v578, %v577
  %v593 = vpack.c.b16 %v580, %v579
  %v594 = vpack.c.b16 %v582, %v581
  %v595 = vpack.c.b16 %v584, %v583
  %v596 = vpack.c.b16 %v586, %v585
  %v597 = vpack.c.b16 %v588, %v587
  %v598 = vpack.c.b16 %v590, %v589
  %607 = vmatprep.subr.bf16.mxu0 0
  %608 = vmatpush1.bf16.msra.mxu0 %v591
  %609 = vmatprep.subr.bf16.mxu0 0
  %610 = vmatpush1.bf16.msra.mxu0 %v592
  %611 = vmatprep.subr.bf16.mxu0 0
  %612 = vmatpush1.bf16.msra.mxu0 %v593
  %613 = vmatprep.subr.bf16.mxu0 0
  %614 = vmatpush1.bf16.msra.mxu0 %v594
  %615 = vmatprep.subr.bf16.mxu0 0
  %616 = vmatpush1.bf16.msra.mxu0 %v595
  %617 = vmatprep.subr.bf16.mxu0 0
  %618 = vmatpush1.bf16.msra.mxu0 %v596
  %619 = vmatprep.subr.bf16.mxu0 0
  %620 = vmatpush1.bf16.msra.mxu0 %v597
  %621 = vmatprep.subr.bf16.mxu0 0
  %622 = vmatpush1.bf16.msra.mxu0 %v598
  %623 = vmatprep.subr.bf16.mxu0 0
  %624 = vmatpush1.bf16.msra.mxu0 0
  %625 = vmatprep.subr.bf16.mxu0 0
  %626 = vmatpush1.bf16.msra.mxu0 0
  %627 = vmatprep.subr.bf16.mxu0 0
  %628 = vmatpush1.bf16.msra.mxu0 0
  %629 = vmatprep.subr.bf16.mxu0 0
  %630 = vmatpush1.bf16.msra.mxu0 0
  %631 = vmatprep.subr.bf16.mxu0 0
  %632 = vmatpush1.bf16.msra.mxu0 0
  %633 = vmatprep.subr.bf16.mxu0 0
  %634 = vmatpush1.bf16.msra.mxu0 0
  %635 = vmatprep.subr.bf16.mxu0 0
  %636 = vmatpush1.bf16.msra.mxu0 0
  %637 = vmatprep.subr.bf16.mxu0 0
  %638 = vmatpush1.bf16.msra.mxu0 0
  %639 = vmatprep.mubr.bf16.mxu0 0
  %640 = vmatmul.mubr.bf16.gmra.mrb[0].mxu0 %v409
  %v641 = vpop.f32.mrb[0].mxu0
  %v642 = vadd.f32 0.0, %v641
  %v643 = vpop.f32.mrb[0].mxu0
  %v644 = vpop.f32.mrb[0].mxu0
  %v645 = vadd.f32 0.0, %v644
  %v646 = vpop.f32.mrb[0].mxu0
  %647 = vmatprep.mubr.bf16.mxu0 0
  %648 = vmatmul.mubr.bf16.gmra.mrb[0].mxu0 %v410
  %v649 = vpop.f32.mrb[0].mxu0
  %v650 = vadd.f32 0.0, %v649
  %v651 = vpop.f32.mrb[0].mxu0
  %v652 = vpop.f32.mrb[0].mxu0
  %v653 = vadd.f32 0.0, %v652
  %v654 = vpop.f32.mrb[0].mxu0
  %655 = vdwg.mxu0
  %v657 = vlaneseq
  %v658 = vshrl.u32 %v657, 7
  %v659 = vsub.s32 0, %v658
  %v660 = vrot.slane %v411, %v659
  %v678 = vunpack.c.l.b16 %v526
  %v679 = vunpack.c.l.b16 %v527
  %v680 = vunpack.c.l.b16 %v528
  %v681 = vunpack.c.l.b16 %v529
  %v682 = vunpack.c.l.b16 %v530
  %v683 = vunpack.c.l.b16 %v531
  %v684 = vunpack.c.l.b16 %v532
  %v685 = vunpack.c.l.b16 %v533
  %v686 = vunpack.c.l.b16 %v534
  %v687 = vunpack.c.l.b16 %v535
  %v688 = vunpack.c.l.b16 %v536
  %v689 = vunpack.c.l.b16 %v537
  %v690 = vunpack.c.l.b16 %v538
  %v691 = vunpack.c.l.b16 %v539
  %v692 = vunpack.c.l.b16 %v540
  %v693 = vunpack.c.l.b16 %v541
  %v694 = vpack.c.b16 %v679, %v678
  %v695 = vpack.c.b16 %v681, %v680
  %v696 = vpack.c.b16 %v683, %v682
  %v697 = vpack.c.b16 %v685, %v684
  %v698 = vpack.c.b16 %v687, %v686
  %v699 = vpack.c.b16 %v689, %v688
  %v700 = vpack.c.b16 %v691, %v690
  %v701 = vpack.c.b16 %v693, %v692
  %710 = vmatprep.subr.bf16.mxu0 0
  %711 = vmatpush1.bf16.msra.mxu0 %v694
  %712 = vmatprep.subr.bf16.mxu0 0
  %713 = vmatpush1.bf16.msra.mxu0 %v695
  %714 = vmatprep.subr.bf16.mxu0 0
  %715 = vmatpush1.bf16.msra.mxu0 %v696
  %716 = vmatprep.subr.bf16.mxu0 0
  %717 = vmatpush1.bf16.msra.mxu0 %v697
  %718 = vmatprep.subr.bf16.mxu0 0
  %719 = vmatpush1.bf16.msra.mxu0 %v698
  %720 = vmatprep.subr.bf16.mxu0 0
  %721 = vmatpush1.bf16.msra.mxu0 %v699
  %722 = vmatprep.subr.bf16.mxu0 0
  %723 = vmatpush1.bf16.msra.mxu0 %v700
  %724 = vmatprep.subr.bf16.mxu0 0
  %725 = vmatpush1.bf16.msra.mxu0 %v701
  %726 = vmatprep.subr.bf16.mxu0 0
  %727 = vmatpush1.bf16.msra.mxu0 0
  %728 = vmatprep.subr.bf16.mxu0 0
  %729 = vmatpush1.bf16.msra.mxu0 0
  %730 = vmatprep.subr.bf16.mxu0 0
  %731 = vmatpush1.bf16.msra.mxu0 0
  %732 = vmatprep.subr.bf16.mxu0 0
  %733 = vmatpush1.bf16.msra.mxu0 0
  %734 = vmatprep.subr.bf16.mxu0 0
  %735 = vmatpush1.bf16.msra.mxu0 0
  %736 = vmatprep.subr.bf16.mxu0 0
  %737 = vmatpush1.bf16.msra.mxu0 0
  %738 = vmatprep.subr.bf16.mxu0 0
  %739 = vmatpush1.bf16.msra.mxu0 0
  %740 = vmatprep.subr.bf16.mxu0 0
  %741 = vmatpush1.bf16.msra.mxu0 0
  %742 = vmatprep.mubr.bf16.mxu0 0
  %743 = vmatmul.mubr.bf16.gmra.mrb[0].mxu0 %v409
  %v744 = vpop.f32.mrb[0].mxu0
  %v745 = vadd.f32 %v660, %v744
  %v746 = vpop.f32.mrb[0].mxu0
  %v747 = vpop.f32.mrb[0].mxu0
  %v748 = vadd.f32 %v660, %v747
  %v749 = vpop.f32.mrb[0].mxu0
  %750 = vmatprep.mubr.bf16.mxu0 0
  %751 = vmatmul.mubr.bf16.gmra.mrb[0].mxu0 %v410
  %v752 = vpop.f32.mrb[0].mxu0
  %v753 = vadd.f32 %v660, %v752
  %v754 = vpop.f32.mrb[0].mxu0
  %v755 = vpop.f32.mrb[0].mxu0
  %v756 = vadd.f32 %v660, %v755
  %v757 = vpop.f32.mrb[0].mxu0
  %758 = vdwg.mxu0
  %v759 = vrot.slane %v511, 7
  %v760 = vrot.slane %v514, 7
  %v761 = vrot.slane %v519, 7
  %v762 = vrot.slane %v522, 7
  %v763 = vsel %vm375, %v761, %v762
  %v764 = vsel %vm375, %v760, %v761
  %v765 = vsel %vm375, %v759, %v760
  %v766 = vsel %vm375, %v762, %v759
  %v767 = vmul.f32 %v82, %v766
  %v768 = vmul.f32 %v83, %v765
  %v769 = vmul.f32 %v84, %v764
  %v770 = vmul.f32 %v85, %v763
  %v771 = vadd.f32 %v745, %v767
  %v772 = vadd.f32 %v748, %v768
  %v773 = vadd.f32 %v753, %v769
  %v774 = vadd.f32 %v756, %v770
  %v775 = vrot.slane %v642, 1
  %v776 = vrot.slane %v645, 1
  %v777 = vrot.slane %v650, 1
  %v778 = vrot.slane %v653, 1
  %v779 = vsel %vm392, %v777, %v778
  %v780 = vsel %vm392, %v776, %v777
  %v781 = vsel %vm392, %v775, %v776
  %v782 = vsel %vm392, %v778, %v775
  %v783 = vmul.f32 %v94, %v781
  %v784 = vmul.f32 %v95, %v780
  %v785 = vmul.f32 %v96, %v779
  %v786 = vmul.f32 %v97, %v782
  %v787 = vadd.f32 %v771, %v783
  %v788 = vadd.f32 %v772, %v784
  %v789 = vadd.f32 %v773, %v785
  %v790 = vadd.f32 %v774, %v786
  %v791 = vmax.f32 %v787, 0.0
  %v792 = vmax.f32 %v788, 0.0
  %v793 = vmax.f32 %v789, 0.0
  %v794 = vmax.f32 %v790, 0.0
  %795 = vst [vmem:[%s5] sm:$0xff] %v791
  %796 = vst [vmem:[%s5 + $0x8] sm:$0xff] %v792
  %797 = vst [vmem:[%s5 + $0x10] sm:$0xff] %v793
  %798 = vst [vmem:[%s5 + $0x18] sm:$0xff] %v794
  // Predicated region
  $region22: #{double_conv2d.1} parent=0 // pred_check
    _
  $region23: #{double_conv2d.1} parent=0 // pred_check_branch
    %800 = sbr.rel (0) target = $region25
  $region24: #{double_conv2d.1} parent=0 // pred_region
    _
  $region25: #{double_conv2d.1} parent=0 // pred_fallthru
    _
  // Predicated region
  $region26: #{double_conv2d.1} parent=0 // pred_check
    _
  $region27: #{double_conv2d.1} parent=0 // pred_check_branch
    %802 = sbr.rel (0) target = $region29
  $region28: #{double_conv2d.1} parent=0 // pred_region
    _
  $region29: #{double_conv2d.1} parent=0 // pred_fallthru
    _

</llo_original>
